<compile_context>
chip_gen: v6e
topology: v6e:2x2x1
jax: 0.10.0
libtpu: 0.0.40
codegen_flags: <defaults>
</compile_context>

<pallas_src>
import jax
import jax.numpy as jnp
from jax.experimental import pallas as pl
from jax.experimental.pallas import tpu as pltpu

# Logical (PyTorch) dims
D_IN, D_H1, D_H2, D_OUT = 20, 500, 10, 4
# (8,128)/(16,128)-aligned padded dims fed to the MXU
P_IN, P_H1, P_H2, P_OUT = 32, 512, 128, 128
NEG_INF = -1e30  # bias for padded class columns so log_softmax is unaffected


def _round_up(n, m):
    return ((n + m - 1) // m) * m


def mlp_logsoftmax_kernel(x_ref, w1_ref, b1_ref, w2_ref, b2_ref, w3_ref, b3_ref,
                          out_ref, xpad_ref):
    mm_dtype = w1_ref.dtype                       # matmul input dtype (bf16 or f32)

    # In-kernel feature pad 20 -> 32 (+ cast): zero the scratch slab, masked-store the
    # 20 real columns. Done every step (megacore-safe: each core has its own scratch).
    xpad_ref[...] = jnp.zeros_like(xpad_ref)
    xpad_ref[:, :D_IN] = x_ref[...].astype(mm_dtype)
    x = xpad_ref[...]                             # (TB, P_IN)

    # fc1 -> relu1 (f32 accumulation, f32 bias/ReLU on the VPU)
    h1 = jnp.dot(x, w1_ref[...], preferred_element_type=jnp.float32) + b1_ref[...]
    h1 = jnp.maximum(h1, 0.0).astype(mm_dtype)
    # fc2 -> relu2
    h2 = jnp.dot(h1, w2_ref[...], preferred_element_type=jnp.float32) + b2_ref[...]
    h2 = jnp.maximum(h2, 0.0).astype(mm_dtype)
    # fc3: padded class columns receive -1e30 from b3.
    # GUARD: the bias add and log_softmax MUST stay in f32 — in bf16, -1e30 saturates to
    # -inf and (shifted - lse) below would become inf - inf = NaN.
    logits = jnp.dot(h2, w3_ref[...], preferred_element_type=jnp.float32) + b3_ref[...]

    # log_softmax over the last dim (padded columns contribute exp(-huge) = 0)
    m = jnp.max(logits, axis=-1, keepdims=True)
    shifted = logits - m
    lse = jnp.log(jnp.sum(jnp.exp(shifted), axis=-1, keepdims=True))
    out_ref[...] = (shifted - lse).astype(out_ref.dtype)


def prepare_params(params, matmul_dtype=jnp.bfloat16):
    """Zero-pad weights/biases to lane/sublane-aligned slabs (done once, on host)."""
    w1, b1, w2, b2, w3, b3 = params

    def pad_w(w, pi, po):
        return jnp.zeros((pi, po), jnp.float32).at[: w.shape[0], : w.shape[1]].set(w)

    def pad_b(b, po, fill=0.0):
        return jnp.full((1, po), fill, jnp.float32).at[:, : b.shape[1]].set(b)

    w1p = pad_w(w1, P_IN, P_H1).astype(matmul_dtype)
    w2p = pad_w(w2, P_H1, P_H2).astype(matmul_dtype)
    w3p = pad_w(w3, P_H2, P_OUT).astype(matmul_dtype)
    b1p = pad_b(b1, P_H1)                     # f32 zeros -> exact through ReLU
    b2p = pad_b(b2, P_H2)
    b3p = pad_b(b3, P_OUT, fill=NEG_INF)      # f32; padded logits never win max / add to sum-exp
    return w1p, b1p, w2p, b2p, w3p, b3p


def net_forward(x, params, *, tb=512, matmul_dtype=jnp.bfloat16):
    """Full Net forward in one batch-tiled pallas_call. Weights stay VMEM-resident."""
    B = x.shape[0]
    assert x.shape[1] == D_IN
    w1p, b1p, w2p, b2p, w3p, b3p = prepare_params(params, matmul_dtype)

    # Tile rows: multiple of 16 (satisfies bf16 (16,128) packing and f32's 8-sublane rule).
    tb = min(tb, _round_up(B, 16))
    # Keep >= 2 grid steps when the batch allows it so dimension_semantics=("parallel",)
    # can shard the batch across v7x's two TensorCores (no-op on single-TC v5e/v6e).
    if B >= 32:
        tb = min(tb, _round_up(pl.cdiv(B, 2), 16))
    grid_b = pl.cdiv(B, tb)
    rows_out = grid_b * tb          # output blocks always full; extra rows sliced off below

    const = lambda shape: pl.BlockSpec(shape, lambda i: (0, 0))  # VMEM-resident operand

    out_itemsize = jnp.finfo(matmul_dtype).bits // 8
    flops = 2 * rows_out * (P_IN * P_H1 + P_H1 * P_H2 + P_H2 * P_OUT)
    bytes_accessed = (
        x.size * x.dtype.itemsize
        + sum(a.size * a.dtype.itemsize for a in (w1p, b1p, w2p, b2p, w3p, b3p))
        + rows_out * P_OUT * out_itemsize
    )
    cost = pl.CostEstimate(
        flops=flops, transcendentals=rows_out * (P_OUT + 1), bytes_accessed=bytes_accessed
    )

    out = pl.pallas_call(
        mlp_logsoftmax_kernel,
        out_shape=jax.ShapeDtypeStruct((rows_out, P_OUT), matmul_dtype),
        grid=(grid_b,),
        in_specs=[
            pl.BlockSpec((tb, D_IN), lambda i: (i, 0)),   # x: batch-tiled, unpadded features
            const((P_IN, P_H1)), const((1, P_H1)),        # fc1 weights/bias (resident)
            const((P_H1, P_H2)), const((1, P_H2)),        # fc2
            const((P_H2, P_OUT)), const((1, P_OUT)),      # fc3
        ],
        out_specs=pl.BlockSpec((tb, P_OUT), lambda i: (i, 0)),  # lane-dense (tb,128) slab
        scratch_shapes=[pltpu.VMEM((tb, P_IN), matmul_dtype)],  # in-kernel x pad buffer
        compiler_params=pltpu.CompilerParams(
            dimension_semantics=("parallel",),            # megacore sharding on v7x
        ),
        cost_estimate=cost,
    )(x, w1p, b1p, w2p, b2p, w3p, b3p)

    # NOTE: never consume the raw slab directly — padded class columns hold ~-1e30 and
    # rows >= B (partial last tile) hold garbage; the slice below is part of the contract.
    return out[:B, :D_OUT].astype(jnp.float32)


def init_params(key):
    """Deterministic init matching PyTorch Linear shapes, stored pre-transposed
    as (in_features, out_features): fc1 20->500, fc2 500->10, fc3 10->4."""
    def linear(key, fan_in, fan_out):
        kw, kb = jax.random.split(key)
        bound = 1.0 / jnp.sqrt(fan_in)
        w = jax.random.uniform(kw, (fan_in, fan_out), jnp.float32, -bound, bound)
        b = jax.random.uniform(kb, (1, fan_out), jnp.float32, -bound, bound)
        return w, b

    k1, k2, k3 = jax.random.split(key, 3)
    w1, b1 = linear(k1, 20, 500)
    w2, b2 = linear(k2, 500, 10)
    w3, b3 = linear(k3, 10, 4)
    return w1, b1, w2, b2, w3, b3


def net_forward_ref(x, params):
    w1, b1, w2, b2, w3, b3 = params
    h1 = jnp.maximum(x @ w1 + b1, 0.0)
    h2 = jnp.maximum(h1 @ w2 + b2, 0.0)
    logits = h2 @ w3 + b3
    return jax.nn.log_softmax(logits, axis=1)


if __name__ == "__main__":
    # TODO(synk): the PyTorch module's self.saved parameter/activation bookkeeping is
    # host-side Python state, not part of the numeric forward; only the math is ported.
    key = jax.random.PRNGKey(0)
    kx, kp = jax.random.split(key)
    batch = 64
    x = jax.random.normal(kx, (batch, 20), jnp.float32)
    params = init_params(kp)
    ref = net_forward_ref(x, params)

    # f32 matmul/output path: tight check against the pure-JAX reference.
    out_f32 = jax.block_until_ready(net_forward(x, params, matmul_dtype=jnp.float32))
    assert out_f32.shape == (batch, 4)
    assert jnp.allclose(out_f32, ref, atol=1e-4, rtol=1e-4), "f32 path mismatch"

    # bf16 fast path (default on all generations): looser tolerance per bf16 precision.
    out_bf16 = jax.block_until_ready(net_forward(x, params))
    assert out_bf16.shape == (batch, 4)
    assert jnp.allclose(out_bf16, ref, atol=5e-2, rtol=5e-2), "bf16 path mismatch"

    print("KERNEL_OK")
</pallas_src>

<mosaic_0001>
module attributes {stable_mosaic.version = 11 : i64} {
  func.func @mlp_logsoftmax_kernel(%arg0: i32, %arg1: memref<32x20xf32, #tpu.memory_space<vmem>>, %arg2: memref<32x512xf32, #tpu.memory_space<vmem>>, %arg3: memref<1x512xf32, #tpu.memory_space<vmem>>, %arg4: memref<512x128xf32, #tpu.memory_space<vmem>>, %arg5: memref<1x128xf32, #tpu.memory_space<vmem>>, %arg6: memref<128x128xf32, #tpu.memory_space<vmem>>, %arg7: memref<1x128xf32, #tpu.memory_space<vmem>>, %arg8: memref<32x128xf32, #tpu.memory_space<vmem>>, %arg9: memref<32x32xf32, #tpu.memory_space<vmem>>) attributes {dimension_semantics = [#tpu.dimension_semantics<parallel>], iteration_bounds = array<i64: 2>, scalar_prefetch = 0 : i64, scratch_operands = 1 : i64, tpu.core_type = #tpu.core_type<tc>, window_params = [{transform_indices = @transform_0, window_bounds = array<i64: 32, 20>}, {pipeline_mode = #tpu.pipeline_mode<synchronous>, transform_indices = @transform_1, window_bounds = array<i64: 32, 512>}, {pipeline_mode = #tpu.pipeline_mode<synchronous>, transform_indices = @transform_2, window_bounds = array<i64: 1, 512>}, {pipeline_mode = #tpu.pipeline_mode<synchronous>, transform_indices = @transform_3, window_bounds = array<i64: 512, 128>}, {pipeline_mode = #tpu.pipeline_mode<synchronous>, transform_indices = @transform_4, window_bounds = array<i64: 1, 128>}, {pipeline_mode = #tpu.pipeline_mode<synchronous>, transform_indices = @transform_5, window_bounds = array<i64: 128, 128>}, {pipeline_mode = #tpu.pipeline_mode<synchronous>, transform_indices = @transform_6, window_bounds = array<i64: 1, 128>}, {transform_indices = @transform_7, window_bounds = array<i64: 32, 128>}]} {
    %cst = arith.constant 0.000000e+00 : f32
    %0 = vector.broadcast %cst : f32 to vector<32x32xf32>
    %c0 = arith.constant 0 : index
    %c0_0 = arith.constant 0 : index
    %1 = vector.load %arg9[%c0, %c0_0] : memref<32x32xf32, #tpu.memory_space<vmem>>, vector<32x32xf32>
    tpu.vector_store %arg9[%c0, %c0_0], %0 {strides = array<i32>} : memref<32x32xf32, #tpu.memory_space<vmem>>, vector<32x32xf32>,
    %c0_1 = arith.constant 0 : index
    %c0_2 = arith.constant 0 : index
    %2 = vector.load %arg1[%c0_1, %c0_2] : memref<32x20xf32, #tpu.memory_space<vmem>>, vector<32x20xf32>
    %c0_3 = arith.constant 0 : index
    %c0_4 = arith.constant 0 : index
    %3 = vector.load %arg9[%c0_3, %c0_4] : memref<32x32xf32, #tpu.memory_space<vmem>>, vector<32x20xf32>
    tpu.vector_store %arg9[%c0_3, %c0_4], %2 {strides = array<i32>} : memref<32x32xf32, #tpu.memory_space<vmem>>, vector<32x20xf32>,
    %c0_5 = arith.constant 0 : index
    %c0_6 = arith.constant 0 : index
    %4 = vector.load %arg9[%c0_5, %c0_6] : memref<32x32xf32, #tpu.memory_space<vmem>>, vector<32x32xf32>
    %c0_7 = arith.constant 0 : index
    %c0_8 = arith.constant 0 : index
    %5 = vector.load %arg2[%c0_7, %c0_8] : memref<32x512xf32, #tpu.memory_space<vmem>>, vector<32x512xf32>
    %cst_9 = arith.constant dense<0.000000e+00> : vector<32x512xf32>
    %6 = tpu.matmul %4, %5, %cst_9 {dimension_numbers = #tpu.dot_dimension_numbers<[1], [0], [0], [1], [0, 0, 1, 1], [], []>} : vector<32x32xf32>, vector<32x512xf32>, vector<32x512xf32> -> vector<32x512xf32>
    %c0_10 = arith.constant 0 : index
    %c0_11 = arith.constant 0 : index
    %7 = vector.load %arg3[%c0_10, %c0_11] : memref<1x512xf32, #tpu.memory_space<vmem>>, vector<1x512xf32>
    %8 = vector.broadcast %7 : vector<1x512xf32> to vector<32x512xf32>
    %9 = arith.addf %6, %8 : vector<32x512xf32>
    %cst_12 = arith.constant 0.000000e+00 : f32
    %10 = vector.broadcast %cst_12 : f32 to vector<32x512xf32>
    %11 = arith.maximumf %9, %10 : vector<32x512xf32>
    %c0_13 = arith.constant 0 : index
    %c0_14 = arith.constant 0 : index
    %12 = vector.load %arg4[%c0_13, %c0_14] : memref<512x128xf32, #tpu.memory_space<vmem>>, vector<512x128xf32>
    %cst_15 = arith.constant dense<0.000000e+00> : vector<32x128xf32>
    %13 = tpu.matmul %11, %12, %cst_15 {dimension_numbers = #tpu.dot_dimension_numbers<[1], [0], [0], [1], [0, 0, 1, 1], [], []>} : vector<32x512xf32>, vector<512x128xf32>, vector<32x128xf32> -> vector<32x128xf32>
    %c0_16 = arith.constant 0 : index
    %c0_17 = arith.constant 0 : index
    %14 = vector.load %arg5[%c0_16, %c0_17] : memref<1x128xf32, #tpu.memory_space<vmem>>, vector<1x128xf32>
    %15 = vector.broadcast %14 : vector<1x128xf32> to vector<32x128xf32>
    %16 = arith.addf %13, %15 : vector<32x128xf32>
    %cst_18 = arith.constant 0.000000e+00 : f32
    %17 = vector.broadcast %cst_18 : f32 to vector<32x128xf32>
    %18 = arith.maximumf %16, %17 : vector<32x128xf32>
    %c0_19 = arith.constant 0 : index
    %c0_20 = arith.constant 0 : index
    %19 = vector.load %arg6[%c0_19, %c0_20] : memref<128x128xf32, #tpu.memory_space<vmem>>, vector<128x128xf32>
    %cst_21 = arith.constant dense<0.000000e+00> : vector<32x128xf32>
    %20 = tpu.matmul %18, %19, %cst_21 {dimension_numbers = #tpu.dot_dimension_numbers<[1], [0], [0], [1], [0, 0, 1, 1], [], []>} : vector<32x128xf32>, vector<128x128xf32>, vector<32x128xf32> -> vector<32x128xf32>
    %c0_22 = arith.constant 0 : index
    %c0_23 = arith.constant 0 : index
    %21 = vector.load %arg7[%c0_22, %c0_23] : memref<1x128xf32, #tpu.memory_space<vmem>>, vector<1x128xf32>
    %22 = vector.broadcast %21 : vector<1x128xf32> to vector<32x128xf32>
    %23 = arith.addf %20, %22 : vector<32x128xf32>
    %cst_24 = arith.constant dense<0xFF800000> : vector<32xf32>
    %24 = vector.multi_reduction <maximumf>, %23, %cst_24 [1] : vector<32x128xf32> to vector<32xf32>
    %25 = vector.shape_cast %24 : vector<32xf32> to vector<32x1xf32>
    %26 = vector.broadcast %25 : vector<32x1xf32> to vector<32x128xf32>
    %27 = arith.subf %23, %26 : vector<32x128xf32>
    %28 = math.exp %27 : vector<32x128xf32>
    %cst_25 = arith.constant dense<0.000000e+00> : vector<32xf32>
    %29 = vector.multi_reduction <add>, %28, %cst_25 [1] : vector<32x128xf32> to vector<32xf32>
    %30 = vector.shape_cast %29 : vector<32xf32> to vector<32x1xf32>
    %31 = math.log %30 : vector<32x1xf32>
    %32 = vector.broadcast %31 : vector<32x1xf32> to vector<32x128xf32>
    %33 = arith.subf %27, %32 : vector<32x128xf32>
    %c0_26 = arith.constant 0 : index
    %c0_27 = arith.constant 0 : index
    %34 = vector.load %arg8[%c0_26, %c0_27] : memref<32x128xf32, #tpu.memory_space<vmem>>, vector<32x128xf32>
    tpu.vector_store %arg8[%c0_26, %c0_27], %33 {strides = array<i32>} : memref<32x128xf32, #tpu.memory_space<vmem>>, vector<32x128xf32>,
    return
  }
  func.func @transform_0(%arg0: i32) -> (i32, i32) {
    %c0_i32 = arith.constant 0 : i32
    %c0_i32_0 = arith.constant 0 : i32
    return %arg0, %c0_i32 : i32, i32
  }
  func.func @transform_1(%arg0: i32) -> (i32, i32) {
    %c0_i32 = arith.constant 0 : i32
    %c0_i32_0 = arith.constant 0 : i32
    %c0_i32_1 = arith.constant 0 : i32
    return %c0_i32, %c0_i32_0 : i32, i32
  }
  func.func @transform_2(%arg0: i32) -> (i32, i32) {
    %c0_i32 = arith.constant 0 : i32
    %c0_i32_0 = arith.constant 0 : i32
    %c0_i32_1 = arith.constant 0 : i32
    return %c0_i32, %c0_i32_0 : i32, i32
  }
  func.func @transform_3(%arg0: i32) -> (i32, i32) {
    %c0_i32 = arith.constant 0 : i32
    %c0_i32_0 = arith.constant 0 : i32
    %c0_i32_1 = arith.constant 0 : i32
    return %c0_i32, %c0_i32_0 : i32, i32
  }
  func.func @transform_4(%arg0: i32) -> (i32, i32) {
    %c0_i32 = arith.constant 0 : i32
    %c0_i32_0 = arith.constant 0 : i32
    %c0_i32_1 = arith.constant 0 : i32
    return %c0_i32, %c0_i32_0 : i32, i32
  }
  func.func @transform_5(%arg0: i32) -> (i32, i32) {
    %c0_i32 = arith.constant 0 : i32
    %c0_i32_0 = arith.constant 0 : i32
    %c0_i32_1 = arith.constant 0 : i32
    return %c0_i32, %c0_i32_0 : i32, i32
  }
  func.func @transform_6(%arg0: i32) -> (i32, i32) {
    %c0_i32 = arith.constant 0 : i32
    %c0_i32_0 = arith.constant 0 : i32
    %c0_i32_1 = arith.constant 0 : i32
    return %c0_i32, %c0_i32_0 : i32, i32
  }
  func.func @transform_7(%arg0: i32) -> (i32, i32) {
    %c0_i32 = arith.constant 0 : i32
    %c0_i32_0 = arith.constant 0 : i32
    return %arg0, %c0_i32 : i32, i32
  }
}

</mosaic_0001>

<llo_original>
// kernel: tpu_custom_call.1
$region0: #{tpu_custom_call.1}
  #allocation0 [shape = 'u32[]', space=smem, size = 0x4, offset = 0x4, fixed_abs, tag = 'smem constant byte address 0x4 - core index']
  #allocation1 [shape = 'u32[144,128]{1,0:T(1,128)}', space=vmem, size = 0x12000, scoped, tag = 'internal scratch']
  #allocation2 [shape = 'f32[32,32]{1,0:T(8,128)}', space=vmem, size = 0x4000, scoped, tag = 'scratch operand']
  %s0 = inlined_call_operand.vmem [shape: f32[64,20], index: 0, kind: input, shape index: {}]
  %s1 = inlined_call_operand.hbm [shape: f32[32,512], index: 1, kind: input, shape index: {}]
  %s2 = inlined_call_operand.vmem [shape: f32[1,512], index: 2, kind: input, shape index: {}]
  %s3 = inlined_call_operand.hbm [shape: f32[512,128], index: 3, kind: input, shape index: {}]
  %s4 = inlined_call_operand.vmem [shape: f32[1,128], index: 4, kind: input, shape index: {}]
  %s5 = inlined_call_operand.hbm [shape: f32[128,128], index: 5, kind: input, shape index: {}]
  %s6 = inlined_call_operand.vmem [shape: f32[1,128], index: 6, kind: input, shape index: {}]
  %s7 = inlined_call_operand.hbm [shape: f32[64,128], index: 7, kind: output, shape index: {}]
  %s8 = sld [smem:[#allocation0]]
  $region73: #{tpu_custom_call.1} parent=0
    _
  %s10 = ssub.s32 1, %s8
  %s11 = scalar_select 0, %s10, %s8
  $region1: #{tpu_custom_call.1} parent=0
    #allocation3 [shape = 'u8[65536]{0}', space=vmem, size = 0x10000, scoped, tag = 'input window, operand 1, single buffered']
    #allocation4 [shape = 's32[2]{0}', space=sflag, size = 0x8, scoped, tag = 'scoped memory for tpu_custom_call.1']
    #allocation5 [shape = 's32[2]{0}', space=sflag, size = 0x8, scoped, tag = 'scoped memory for tpu_custom_call.1']
    #allocation6 [shape = 'u8[262144]{0}', space=vmem, size = 0x40000, scoped, tag = 'input window, operand 3, single buffered']
    #allocation7 [shape = 's32[1]{0}', space=sflag, size = 0x4, scoped, tag = 'scoped memory for tpu_custom_call.1']
    #allocation8 [shape = 'u8[65536]{0}', space=vmem, size = 0x10000, scoped, tag = 'input window, operand 5, single buffered']
    #allocation9 [shape = 'u8[32768]{0}', space=vmem, size = 0x8000, scoped, tag = 'output window, operand 0']
    %12 = vsyncpa [#allocation4], 0
    %13 = vsyncpa [#allocation7], 0
    %14 = vsyncpa [#allocation5], 0
    %s15 = scalar_lea.sflag [#allocation5], 1
    %16 = vsyncpa %s15, 0
    loop: start=0, step=1, limit=4
    $region2: #{tpu_custom_call.1} parent=1 // loop_pre_header
      _
    $region3: #{tpu_custom_call.1} parent=1 // loop_header
      %s18 = sphi 0, %s22
      %p19 = scmp.ge.s32.totalorder %s18, 4
      %s28 = sphi 0, %s30
      %s31 = sphi 0, %s28
      %s32 = sphi 0, %s31
      %s48 = sphi 0, %s32
      %s52 = sphi 0, %s52
      %s54 = sphi 0, %s52
      %s55 = sphi 0, %s54
      %s69 = sphi 0, %s55
      %s73 = sphi 0, %s73
      %s75 = sphi 0, %s73
      %s76 = sphi 0, %s75
      %s90 = sphi 0, %s76
      %s94 = sphi 0, %s94
      %s96 = sphi 0, %s94
      %s97 = sphi 0, %s96
      %s111 = sphi 0, %s97
      %s115 = sphi 0, %s115
      %s117 = sphi 0, %s115
      %s118 = sphi 0, %s117
      %s132 = sphi 0, %s118
      %s136 = sphi 0, %s136
      %s138 = sphi 0, %s136
      %s139 = sphi 0, %s138
      %s153 = sphi 0, %s139
      %s157 = sphi 0, %s157
      %s159 = sphi 0, %s157
      %s160 = sphi 0, %s159
      %s174 = sphi 0, %s160
      %s180 = sphi 0, %s182
      %s183 = sphi 0, %s180
      %s184 = sphi 0, %s183
      %s200 = sphi 0, %s184
    $region4: #{tpu_custom_call.1} parent=1 // loop_header_branch
      %21 = sbr.rel (%p19) target = $region8
    $region5: #{tpu_custom_call.1} parent=1 // loop_body
      %s23 = ssub.s32 %s18, 1
      %s24 = ssub.s32 %s18, 2
      %s25 = sadd.s32 %s18, 1
      %s26 = ssub.s32 %s18, %s25
      %p27 = scmp.eq.s32.totalorder %s26, 0
      %s29 = sadd.s32 %s28, 1
      %s30 = scalar_select %p27, %s28, %s29
      %p33 = pneg %p27
      %p34 = scmp.eq.s32.totalorder %s18, 1
      %p35 = por %p33, %p34
      %p36 = scmp.ne.s32.totalorder %s28, %s31
      %p37 = scmp.eq.s32.totalorder %s18, 0
      %p38 = por %p36, %p37
      %p39 = scmp.ne.s32.totalorder %s28, %s31
      %p40 = scmp.eq.s32.totalorder %s23, 1
      %p41 = por %p39, %p40
      %p42 = scmp.ne.s32.totalorder %s31, %s32
      %p43 = scmp.eq.s32.totalorder %s23, 0
      %p44 = por %p42, %p43
      %p45 = scmp.ne.s32.totalorder %s31, %s32
      %p46 = scmp.eq.s32.totalorder %s24, 1
      %p47 = por %p45, %p46
      %p49 = scmp.ne.s32.totalorder %s32, %s48
      %p50 = scmp.eq.s32.totalorder %s24, 0
      %p51 = por %p49, %p50
      %s53 = sadd.s32 %s52, 1
      %p56 = scmp.eq.s32.totalorder %s18, 1
      %p57 = scmp.ne.s32.totalorder %s52, %s54
      %p58 = scmp.eq.s32.totalorder %s18, 0
      %p59 = por %p57, %p58
      %p60 = scmp.ne.s32.totalorder %s52, %s54
      %p61 = scmp.eq.s32.totalorder %s23, 1
      %p62 = por %p60, %p61
      %p63 = scmp.ne.s32.totalorder %s54, %s55
      %p64 = scmp.eq.s32.totalorder %s23, 0
      %p65 = por %p63, %p64
      %p66 = scmp.ne.s32.totalorder %s54, %s55
      %p67 = scmp.eq.s32.totalorder %s24, 1
      %p68 = por %p66, %p67
      %p70 = scmp.ne.s32.totalorder %s55, %s69
      %p71 = scmp.eq.s32.totalorder %s24, 0
      %p72 = por %p70, %p71
      %s74 = sadd.s32 %s73, 1
      %p77 = scmp.eq.s32.totalorder %s18, 1
      %p78 = scmp.ne.s32.totalorder %s73, %s75
      %p79 = scmp.eq.s32.totalorder %s18, 0
      %p80 = por %p78, %p79
      %p81 = scmp.ne.s32.totalorder %s73, %s75
      %p82 = scmp.eq.s32.totalorder %s23, 1
      %p83 = por %p81, %p82
      %p84 = scmp.ne.s32.totalorder %s75, %s76
      %p85 = scmp.eq.s32.totalorder %s23, 0
      %p86 = por %p84, %p85
      %p87 = scmp.ne.s32.totalorder %s75, %s76
      %p88 = scmp.eq.s32.totalorder %s24, 1
      %p89 = por %p87, %p88
      %p91 = scmp.ne.s32.totalorder %s76, %s90
      %p92 = scmp.eq.s32.totalorder %s24, 0
      %p93 = por %p91, %p92
      %s95 = sadd.s32 %s94, 1
      %p98 = scmp.eq.s32.totalorder %s18, 1
      %p99 = scmp.ne.s32.totalorder %s94, %s96
      %p100 = scmp.eq.s32.totalorder %s18, 0
      %p101 = por %p99, %p100
      %p102 = scmp.ne.s32.totalorder %s94, %s96
      %p103 = scmp.eq.s32.totalorder %s23, 1
      %p104 = por %p102, %p103
      %p105 = scmp.ne.s32.totalorder %s96, %s97
      %p106 = scmp.eq.s32.totalorder %s23, 0
      %p107 = por %p105, %p106
      %p108 = scmp.ne.s32.totalorder %s96, %s97
      %p109 = scmp.eq.s32.totalorder %s24, 1
      %p110 = por %p108, %p109
      %p112 = scmp.ne.s32.totalorder %s97, %s111
      %p113 = scmp.eq.s32.totalorder %s24, 0
      %p114 = por %p112, %p113
      %s116 = sadd.s32 %s115, 1
      %p119 = scmp.eq.s32.totalorder %s18, 1
      %p120 = scmp.ne.s32.totalorder %s115, %s117
      %p121 = scmp.eq.s32.totalorder %s18, 0
      %p122 = por %p120, %p121
      %p123 = scmp.ne.s32.totalorder %s115, %s117
      %p124 = scmp.eq.s32.totalorder %s23, 1
      %p125 = por %p123, %p124
      %p126 = scmp.ne.s32.totalorder %s117, %s118
      %p127 = scmp.eq.s32.totalorder %s23, 0
      %p128 = por %p126, %p127
      %p129 = scmp.ne.s32.totalorder %s117, %s118
      %p130 = scmp.eq.s32.totalorder %s24, 1
      %p131 = por %p129, %p130
      %p133 = scmp.ne.s32.totalorder %s118, %s132
      %p134 = scmp.eq.s32.totalorder %s24, 0
      %p135 = por %p133, %p134
      %s137 = sadd.s32 %s136, 1
      %p140 = scmp.eq.s32.totalorder %s18, 1
      %p141 = scmp.ne.s32.totalorder %s136, %s138
      %p142 = scmp.eq.s32.totalorder %s18, 0
      %p143 = por %p141, %p142
      %p144 = scmp.ne.s32.totalorder %s136, %s138
      %p145 = scmp.eq.s32.totalorder %s23, 1
      %p146 = por %p144, %p145
      %p147 = scmp.ne.s32.totalorder %s138, %s139
      %p148 = scmp.eq.s32.totalorder %s23, 0
      %p149 = por %p147, %p148
      %p150 = scmp.ne.s32.totalorder %s138, %s139
      %p151 = scmp.eq.s32.totalorder %s24, 1
      %p152 = por %p150, %p151
      %p154 = scmp.ne.s32.totalorder %s139, %s153
      %p155 = scmp.eq.s32.totalorder %s24, 0
      %p156 = por %p154, %p155
      %s158 = sadd.s32 %s157, 1
      %p161 = scmp.eq.s32.totalorder %s18, 1
      %p162 = scmp.ne.s32.totalorder %s157, %s159
      %p163 = scmp.eq.s32.totalorder %s18, 0
      %p164 = por %p162, %p163
      %p165 = scmp.ne.s32.totalorder %s157, %s159
      %p166 = scmp.eq.s32.totalorder %s23, 1
      %p167 = por %p165, %p166
      %p168 = scmp.ne.s32.totalorder %s159, %s160
      %p169 = scmp.eq.s32.totalorder %s23, 0
      %p170 = por %p168, %p169
      %p171 = scmp.ne.s32.totalorder %s159, %s160
      %p172 = scmp.eq.s32.totalorder %s24, 1
      %p173 = por %p171, %p172
      %p175 = scmp.ne.s32.totalorder %s160, %s174
      %p176 = scmp.eq.s32.totalorder %s24, 0
      %p177 = por %p175, %p176
      %s178 = ssub.s32 %s18, %s25
      %p179 = scmp.eq.s32.totalorder %s178, 0
      %s181 = sadd.s32 %s180, 1
      %s182 = scalar_select %p179, %s180, %s181
      %p185 = pneg %p179
      %p186 = scmp.eq.s32.totalorder %s18, 1
      %p187 = por %p185, %p186
      %p188 = scmp.ne.s32.totalorder %s180, %s183
      %p189 = scmp.eq.s32.totalorder %s18, 0
      %p190 = por %p188, %p189
      %p191 = scmp.ne.s32.totalorder %s180, %s183
      %p192 = scmp.eq.s32.totalorder %s23, 1
      %p193 = por %p191, %p192
      %p194 = scmp.ne.s32.totalorder %s183, %s184
      %p195 = scmp.eq.s32.totalorder %s23, 0
      %p196 = por %p194, %p195
      %p197 = scmp.ne.s32.totalorder %s183, %s184
      %p198 = scmp.eq.s32.totalorder %s24, 1
      %p199 = por %p197, %p198
      %p201 = scmp.ne.s32.totalorder %s184, %s200
      %p202 = scmp.eq.s32.totalorder %s24, 0
      %p203 = por %p201, %p202
      %p204 = scmp.le.s32.totalorder 1, %s18
      %p205 = scmp.lt.s32.totalorder %s18, 3
      %p206 = pnand %p204, %p205
      %p207 = pneg %p206
      // Predicated region
      $region9: #{tpu_custom_call.1} parent=5 // pred_check
        _
      $region10: #{tpu_custom_call.1} parent=5 // pred_check_branch
        %209 = sbr.rel (%p206) target = $region12
      $region11: #{tpu_custom_call.1} parent=5 // pred_region
        %s210 = ssub.s32 %s18, 1
        // Predicated region
        $region13: #{tpu_custom_call.1} parent=11 // pred_check
          %p211 = pneg %p65
        $region14: #{tpu_custom_call.1} parent=11 // pred_check_branch
          %213 = sbr.rel (%p211) target = $region16
        $region15: #{tpu_custom_call.1} parent=11 // pred_region
          %s215 = ssub.s32 2048, 2048
          %216 = vsyncadd [#allocation4], %s215
          %s217 = sshll.u32 [#allocation3], 4
          %s218 = int_to_ptr.vmem [resolvable:$true] %s217
          %223 = dma.hbm_to_vmem [thread:$0]  %s1, 2048, %s218, [#allocation4], 512, 512, 32
        $region16: #{tpu_custom_call.1} parent=11 // pred_fallthru
          _
        // Predicated region
        $region17: #{tpu_custom_call.1} parent=11 // pred_check
          %p224 = pneg %p86
        $region18: #{tpu_custom_call.1} parent=11 // pred_check_branch
          %226 = sbr.rel (%p224) target = $region20
        $region19: #{tpu_custom_call.1} parent=11 // pred_region
          _
        $region20: #{tpu_custom_call.1} parent=11 // pred_fallthru
          _
        // Predicated region
        $region21: #{tpu_custom_call.1} parent=11 // pred_check
          %p227 = pneg %p107
        $region22: #{tpu_custom_call.1} parent=11 // pred_check_branch
          %229 = sbr.rel (%p227) target = $region24
        $region23: #{tpu_custom_call.1} parent=11 // pred_region
          %s231 = ssub.s32 8192, 8192
          %232 = vsyncadd [#allocation7], %s231
          %s233 = sshll.u32 [#allocation6], 4
          %s234 = int_to_ptr.vmem [resolvable:$true] %s233
          %239 = dma.hbm_to_vmem [thread:$0]  %s3, 8192, %s234, [#allocation7], 128, 128, 8
        $region24: #{tpu_custom_call.1} parent=11 // pred_fallthru
          _
        // Predicated region
        $region25: #{tpu_custom_call.1} parent=11 // pred_check
          %p240 = pneg %p128
        $region26: #{tpu_custom_call.1} parent=11 // pred_check_branch
          %242 = sbr.rel (%p240) target = $region28
        $region27: #{tpu_custom_call.1} parent=11 // pred_region
          _
        $region28: #{tpu_custom_call.1} parent=11 // pred_fallthru
          _
        // Predicated region
        $region29: #{tpu_custom_call.1} parent=11 // pred_check
          %p243 = pneg %p149
        $region30: #{tpu_custom_call.1} parent=11 // pred_check_branch
          %245 = sbr.rel (%p243) target = $region32
        $region31: #{tpu_custom_call.1} parent=11 // pred_region
          %s247 = ssub.s32 2048, 2048
          %248 = vsyncadd [#allocation7], %s247
          %s249 = sshll.u32 [#allocation8], 4
          %s250 = int_to_ptr.vmem [resolvable:$true] %s249
          %255 = dma.hbm_to_vmem [thread:$0]  %s5, 2048, %s250, [#allocation7], 128, 128, 8
        $region32: #{tpu_custom_call.1} parent=11 // pred_fallthru
          _
        // Predicated region
        $region33: #{tpu_custom_call.1} parent=11 // pred_check
          %p256 = pneg %p170
        $region34: #{tpu_custom_call.1} parent=11 // pred_check_branch
          %258 = sbr.rel (%p256) target = $region36
        $region35: #{tpu_custom_call.1} parent=11 // pred_region
          _
        $region36: #{tpu_custom_call.1} parent=11 // pred_fallthru
          _
      $region12: #{tpu_custom_call.1} parent=5 // pred_fallthru
        _
      %p259 = scmp.lt.s32.totalorder %s18, 2
      // Predicated region
      $region37: #{tpu_custom_call.1} parent=5 // pred_check
        %p260 = pneg %p259
      $region38: #{tpu_custom_call.1} parent=5 // pred_check_branch
        %262 = sbr.rel (%p260) target = $region40
      $region39: #{tpu_custom_call.1} parent=5 // pred_region
        // Predicated region
        $region41: #{tpu_custom_call.1} parent=39 // pred_check
          %p263 = pneg %p38
        $region42: #{tpu_custom_call.1} parent=39 // pred_check_branch
          %265 = sbr.rel (%p263) target = $region44
        $region43: #{tpu_custom_call.1} parent=39 // pred_region
          %s266 = smul.u32 4, %s18
          %p267 = scmp.lt.s32.totalorder %s266, 7
          %s268 = scalar_select %p267, %s266, 7
          %s269 = smul.addr %s268, 8
          %s270 = scalar_lea.vmem %s0, %s269
          %s271 = smul.u32 4, %s18
        $region44: #{tpu_custom_call.1} parent=39 // pred_fallthru
          _
      $region40: #{tpu_custom_call.1} parent=5 // pred_fallthru
        _
      %p272 = scmp.le.s32.totalorder 1, %s18
      %p273 = scmp.lt.s32.totalorder %s18, 3
      %p274 = pnand %p272, %p273
      %p275 = pneg %p274
      // Predicated region
      $region45: #{tpu_custom_call.1} parent=5 // pred_check
        _
      $region46: #{tpu_custom_call.1} parent=5 // pred_check_branch
        %277 = sbr.rel (%p274) target = $region48
      $region47: #{tpu_custom_call.1} parent=5 // pred_region
        %s278 = ssub.s32 %s18, 1
        // Predicated region
        $region49: #{tpu_custom_call.1} parent=47 // pred_check
          %p279 = pneg %p65
        $region50: #{tpu_custom_call.1} parent=47 // pred_check_branch
          %281 = sbr.rel (%p279) target = $region52
        $region51: #{tpu_custom_call.1} parent=47 // pred_region
          %282 = dma.done [#allocation4], 2048
        $region52: #{tpu_custom_call.1} parent=47 // pred_fallthru
          _
        // Predicated region
        $region53: #{tpu_custom_call.1} parent=47 // pred_check
          %p283 = pneg %p107
        $region54: #{tpu_custom_call.1} parent=47 // pred_check_branch
          %285 = sbr.rel (%p283) target = $region56
        $region55: #{tpu_custom_call.1} parent=47 // pred_region
          %286 = dma.done [#allocation7], 8192
        $region56: #{tpu_custom_call.1} parent=47 // pred_fallthru
          _
        // Predicated region
        $region57: #{tpu_custom_call.1} parent=47 // pred_check
          %p287 = pneg %p149
        $region58: #{tpu_custom_call.1} parent=47 // pred_check_branch
          %289 = sbr.rel (%p287) target = $region60
        $region59: #{tpu_custom_call.1} parent=47 // pred_region
          %290 = dma.done [#allocation7], 2048
        $region60: #{tpu_custom_call.1} parent=47 // pred_fallthru
          _
        %s291 = smul.u32 4, %s23
        %p292 = scmp.lt.s32.totalorder %s291, 7
        %s293 = scalar_select %p292, %s291, 7
        %s294 = smul.addr %s293, 8
        %s295 = scalar_lea.vmem %s0, %s294
        %p296 = pneg %p44
        %p297 = pneg %p41
        %p298 = pneg %p65
        %p299 = pneg %p62
        %p300 = pneg %p86
        %p301 = pneg %p83
        %p302 = pneg %p107
        %p303 = pneg %p104
        %p304 = pneg %p128
        %p305 = pneg %p125
        %p306 = pneg %p149
        %p307 = pneg %p146
        %p308 = pneg %p170
        %p309 = pneg %p167
        %p310 = pneg %p196
        %p311 = pneg %p193
        %s312 = sand.u32 %s183, 1
        %s313 = scalar_lea.sflag [#allocation5], %s312
        %s314 = sand.u32 %s183, 1
        %s315 = smul.addr %s314, 32
        %s316 = scalar_lea.vmem [#allocation9], %s315
        %s317 = smul.u32 4, %s23
        %p318 = scmp.lt.s32.totalorder %s317, 7
        %s319 = scalar_select %p318, %s317, 7
        %s320 = smul.addr %s319, 8
        %s321 = scalar_lea.vmem %s0, %s320
        %s322 = smul.u32 4, %s23
        %s323 = smul.u32 4, %s23
        %vm324 = vcmask 261120
        %325 = vst.msk [vmem:[#allocation2] sm:$0xff] %vm324, 0.0
        %326 = vst.msk [vmem:[#allocation2 + $0x8] sm:$0xff] %vm324, 0.0
        %327 = vst.msk [vmem:[#allocation2 + $0x10] sm:$0xff] %vm324, 0.0
        %328 = vst.msk [vmem:[#allocation2 + $0x18] sm:$0xff] %vm324, 0.0
        %v329 = vld [vmem:[%s321] sm:$0xff]
        %v330 = vld [vmem:[%s321 + $0x8] sm:$0xff]
        %v331 = vld [vmem:[%s321 + $0x10] sm:$0xff]
        %v332 = vld [vmem:[%s321 + $0x18] sm:$0xff]
        %vm333 = vcmask 162816
        %334 = vst.msk [vmem:[#allocation2] sm:$0xff] %vm333, %v329
        %335 = vst.msk [vmem:[#allocation2 + $0x8] sm:$0xff] %vm333, %v330
        %336 = vst.msk [vmem:[#allocation2 + $0x10] sm:$0xff] %vm333, %v331
        %337 = vst.msk [vmem:[#allocation2 + $0x18] sm:$0xff] %vm333, %v332
        %v338 = vld [vmem:[#allocation2] sm:$0xff]
        %v339 = vld [vmem:[#allocation2 + $0x8] sm:$0xff]
        %v340 = vld [vmem:[#allocation2 + $0x10] sm:$0xff]
        %v341 = vld [vmem:[#allocation2 + $0x18] sm:$0xff]
        %v342 = vld [vmem:[#allocation3] sm:$0xff]
        %v343 = vld [vmem:[#allocation3 + $0x8] sm:$0xff]
        %v344 = vld [vmem:[#allocation3 + $0x10] sm:$0xff]
        %v345 = vld [vmem:[#allocation3 + $0x18] sm:$0xff]
        %v346 = vld [vmem:[#allocation3 + $0x20] sm:$0xff]
        %v347 = vld [vmem:[#allocation3 + $0x28] sm:$0xff]
        %v348 = vld [vmem:[#allocation3 + $0x30] sm:$0xff]
        %v349 = vld [vmem:[#allocation3 + $0x38] sm:$0xff]
        %v350 = vld [vmem:[#allocation3 + $0x40] sm:$0xff]
        %v351 = vld [vmem:[#allocation3 + $0x48] sm:$0xff]
        %v352 = vld [vmem:[#allocation3 + $0x50] sm:$0xff]
        %v353 = vld [vmem:[#allocation3 + $0x58] sm:$0xff]
        %v354 = vld [vmem:[#allocation3 + $0x60] sm:$0xff]
        %v355 = vld [vmem:[#allocation3 + $0x68] sm:$0xff]
        %v356 = vld [vmem:[#allocation3 + $0x70] sm:$0xff]
        %v357 = vld [vmem:[#allocation3 + $0x78] sm:$0xff]
        %v358 = vld [vmem:[%s2] sm:$0xf]
        %v360 = vlaneseq
        %v361 = vshrl.u32 %v360, 7
        %v362 = vsub.s32 0, %v361
        %v363 = vrot.slane %v358, %v362
        %v364 = vlaneseq
        %v365 = vshrl.u32 %v364, 7
        %v366 = vsub.s32 1, %v365
        %v367 = vrot.slane %v358, %v366
        %v368 = vlaneseq
        %v369 = vshrl.u32 %v368, 7
        %v370 = vsub.s32 2, %v369
        %v371 = vrot.slane %v358, %v370
        %v372 = vlaneseq
        %v373 = vshrl.u32 %v372, 7
        %v374 = vsub.s32 3, %v373
        %v375 = vrot.slane %v358, %v374
        %v381 = vsel %vm324, %v338, 0
        %v384 = vsel %vm324, %v339, 0
        %v387 = vsel %vm324, %v340, 0
        %v390 = vsel %vm324, %v341, 0
        %392 = vmatprep.subr.mxu0 0.0
        %393 = vmatpush1.msra.mxu0 0.0
        %394 = vmatprep.subr.mxu0 0.0
        %395 = vmatpush1.msra.mxu0 0.0
        %396 = vmatprep.subr.mxu0 0.0
        %397 = vmatpush1.msra.mxu0 0.0
        %398 = vmatprep.subr.mxu0 0.0
        %399 = vmatpush1.msra.mxu0 0.0
        %400 = vmatprep.subr.mxu0 0.0
        %401 = vmatpush1.msra.mxu0 0.0
        %402 = vmatprep.subr.mxu0 0.0
        %403 = vmatpush1.msra.mxu0 0.0
        %404 = vmatprep.subr.mxu0 0.0
        %405 = vmatpush1.msra.mxu0 0.0
        %406 = vmatprep.subr.mxu0 0.0
        %407 = vmatpush1.msra.mxu0 0.0
        %408 = vmatprep.subr.mxu0 0.0
        %409 = vmatpush1.msra.mxu0 0.0
        %410 = vmatprep.subr.mxu0 0.0
        %411 = vmatpush1.msra.mxu0 0.0
        %412 = vmatprep.subr.mxu0 0.0
        %413 = vmatpush1.msra.mxu0 0.0
        %414 = vmatprep.subr.mxu0 0.0
        %415 = vmatpush1.msra.mxu0 0.0
        %416 = vmatprep.subr.mxu0 %v355
        %417 = vmatpush1.msra.mxu0 %v354
        %418 = vmatprep.subr.mxu0 %v351
        %419 = vmatpush1.msra.mxu0 %v350
        %420 = vmatprep.subr.mxu0 %v347
        %421 = vmatpush1.msra.mxu0 %v346
        %422 = vmatprep.subr.mxu0 %v343
        %423 = vmatpush1.msra.mxu0 %v342
        %424 = vmatprep.subr.mxu0 0.0
        %425 = vmatpush2.msra.mxu0 0.0
        %426 = vmatprep.subr.mxu0 0.0
        %427 = vmatpush2.msra.mxu0 0.0
        %428 = vmatprep.subr.mxu0 0.0
        %429 = vmatpush2.msra.mxu0 0.0
        %430 = vmatprep.subr.mxu0 0.0
        %431 = vmatpush2.msra.mxu0 0.0
        %432 = vmatprep.subr.mxu0 0.0
        %433 = vmatpush2.msra.mxu0 0.0
        %434 = vmatprep.subr.mxu0 0.0
        %435 = vmatpush2.msra.mxu0 0.0
        %436 = vmatprep.subr.mxu0 0.0
        %437 = vmatpush2.msra.mxu0 0.0
        %438 = vmatprep.subr.mxu0 0.0
        %439 = vmatpush2.msra.mxu0 0.0
        %440 = vmatprep.subr.mxu0 0.0
        %441 = vmatpush2.msra.mxu0 0.0
        %442 = vmatprep.subr.mxu0 0.0
        %443 = vmatpush2.msra.mxu0 0.0
        %444 = vmatprep.subr.mxu0 0.0
        %445 = vmatpush2.msra.mxu0 0.0
        %446 = vmatprep.subr.mxu0 0.0
        %447 = vmatpush2.msra.mxu0 0.0
        %448 = vmatprep.subr.mxu0 0.0
        %449 = vmatpush2.msra.mxu0 0.0
        %450 = vmatprep.subr.mxu0 0.0
        %451 = vmatpush2.msra.mxu0 0.0
        %452 = vmatprep.subr.mxu0 0.0
        %453 = vmatpush2.msra.mxu0 0.0
        %454 = vmatprep.subr.mxu0 0.0
        %455 = vmatpush2.msra.mxu0 0.0
        %456 = vmatprep.mubr.f32.mxu0 0.0
        %457 = vmatmul.mubr.f32.gmra.mxu0 %v381
        %v458 = vpop.f32.mrf.mxu0
        %v459 = vadd.f32 %v363, %v458
        %v460 = vpop.f32.mrf.mxu0
        %v461 = vadd.f32 %v367, %v460
        %462 = vmatprep.mubr.f32.mxu0 0.0
        %463 = vmatmul.mubr.f32.gmra.mxu0 %v384
        %v464 = vpop.f32.mrf.mxu0
        %v465 = vadd.f32 %v363, %v464
        %v466 = vpop.f32.mrf.mxu0
        %v467 = vadd.f32 %v367, %v466
        %468 = vmatprep.mubr.f32.mxu0 0.0
        %469 = vmatmul.mubr.f32.gmra.mxu0 %v387
        %v470 = vpop.f32.mrf.mxu0
        %v471 = vadd.f32 %v363, %v470
        %v472 = vpop.f32.mrf.mxu0
        %v473 = vadd.f32 %v367, %v472
        %474 = vmatprep.mubr.f32.mxu0 0.0
        %475 = vmatmul.mubr.f32.gmra.mxu0 %v390
        %v476 = vpop.f32.mrf.mxu0
        %v477 = vadd.f32 %v363, %v476
        %v478 = vpop.f32.mrf.mxu0
        %v479 = vadd.f32 %v367, %v478
        %480 = vdwg.mxu0
        %481 = vmatprep.subr.mxu0 0.0
        %482 = vmatpush1.msra.mxu0 0.0
        %483 = vmatprep.subr.mxu0 0.0
        %484 = vmatpush1.msra.mxu0 0.0
        %485 = vmatprep.subr.mxu0 0.0
        %486 = vmatpush1.msra.mxu0 0.0
        %487 = vmatprep.subr.mxu0 0.0
        %488 = vmatpush1.msra.mxu0 0.0
        %489 = vmatprep.subr.mxu0 0.0
        %490 = vmatpush1.msra.mxu0 0.0
        %491 = vmatprep.subr.mxu0 0.0
        %492 = vmatpush1.msra.mxu0 0.0
        %493 = vmatprep.subr.mxu0 0.0
        %494 = vmatpush1.msra.mxu0 0.0
        %495 = vmatprep.subr.mxu0 0.0
        %496 = vmatpush1.msra.mxu0 0.0
        %497 = vmatprep.subr.mxu0 0.0
        %498 = vmatpush1.msra.mxu0 0.0
        %499 = vmatprep.subr.mxu0 0.0
        %500 = vmatpush1.msra.mxu0 0.0
        %501 = vmatprep.subr.mxu0 0.0
        %502 = vmatpush1.msra.mxu0 0.0
        %503 = vmatprep.subr.mxu0 0.0
        %504 = vmatpush1.msra.mxu0 0.0
        %505 = vmatprep.subr.mxu0 %v357
        %506 = vmatpush1.msra.mxu0 %v356
        %507 = vmatprep.subr.mxu0 %v353
        %508 = vmatpush1.msra.mxu0 %v352
        %509 = vmatprep.subr.mxu0 %v349
        %510 = vmatpush1.msra.mxu0 %v348
        %511 = vmatprep.subr.mxu0 %v345
        %512 = vmatpush1.msra.mxu0 %v344
        %513 = vmatprep.subr.mxu0 0.0
        %514 = vmatpush2.msra.mxu0 0.0
        %515 = vmatprep.subr.mxu0 0.0
        %516 = vmatpush2.msra.mxu0 0.0
        %517 = vmatprep.subr.mxu0 0.0
        %518 = vmatpush2.msra.mxu0 0.0
        %519 = vmatprep.subr.mxu0 0.0
        %520 = vmatpush2.msra.mxu0 0.0
        %521 = vmatprep.subr.mxu0 0.0
        %522 = vmatpush2.msra.mxu0 0.0
        %523 = vmatprep.subr.mxu0 0.0
        %524 = vmatpush2.msra.mxu0 0.0
        %525 = vmatprep.subr.mxu0 0.0
        %526 = vmatpush2.msra.mxu0 0.0
        %527 = vmatprep.subr.mxu0 0.0
        %528 = vmatpush2.msra.mxu0 0.0
        %529 = vmatprep.subr.mxu0 0.0
        %530 = vmatpush2.msra.mxu0 0.0
        %531 = vmatprep.subr.mxu0 0.0
        %532 = vmatpush2.msra.mxu0 0.0
        %533 = vmatprep.subr.mxu0 0.0
        %534 = vmatpush2.msra.mxu0 0.0
        %535 = vmatprep.subr.mxu0 0.0
        %536 = vmatpush2.msra.mxu0 0.0
        %537 = vmatprep.subr.mxu0 0.0
        %538 = vmatpush2.msra.mxu0 0.0
        %539 = vmatprep.subr.mxu0 0.0
        %540 = vmatpush2.msra.mxu0 0.0
        %541 = vmatprep.subr.mxu0 0.0
        %542 = vmatpush2.msra.mxu0 0.0
        %543 = vmatprep.subr.mxu0 0.0
        %544 = vmatpush2.msra.mxu0 0.0
        %545 = vmatprep.mubr.f32.mxu0 0.0
        %546 = vmatmul.mubr.f32.gmra.mxu0 %v381
        %v547 = vpop.f32.mrf.mxu0
        %v548 = vadd.f32 %v371, %v547
        %v549 = vpop.f32.mrf.mxu0
        %v550 = vadd.f32 %v375, %v549
        %551 = vmatprep.mubr.f32.mxu0 0.0
        %552 = vmatmul.mubr.f32.gmra.mxu0 %v384
        %v553 = vpop.f32.mrf.mxu0
        %v554 = vadd.f32 %v371, %v553
        %v555 = vpop.f32.mrf.mxu0
        %v556 = vadd.f32 %v375, %v555
        %557 = vmatprep.mubr.f32.mxu0 0.0
        %558 = vmatmul.mubr.f32.gmra.mxu0 %v387
        %v559 = vpop.f32.mrf.mxu0
        %v560 = vadd.f32 %v371, %v559
        %v561 = vpop.f32.mrf.mxu0
        %v562 = vadd.f32 %v375, %v561
        %563 = vmatprep.mubr.f32.mxu0 0.0
        %564 = vmatmul.mubr.f32.gmra.mxu0 %v390
        %v565 = vpop.f32.mrf.mxu0
        %v566 = vadd.f32 %v371, %v565
        %v567 = vpop.f32.mrf.mxu0
        %v568 = vadd.f32 %v375, %v567
        %569 = vdwg.mxu0
        %v570 = vmax.f32 %v459, 0.0
        %v571 = vmax.f32 %v461, 0.0
        %v572 = vmax.f32 %v548, 0.0
        %v573 = vmax.f32 %v550, 0.0
        %v574 = vmax.f32 %v465, 0.0
        %v575 = vmax.f32 %v467, 0.0
        %v576 = vmax.f32 %v554, 0.0
        %v577 = vmax.f32 %v556, 0.0
        %v578 = vmax.f32 %v471, 0.0
        %v579 = vmax.f32 %v473, 0.0
        %v580 = vmax.f32 %v560, 0.0
        %v581 = vmax.f32 %v562, 0.0
        %v582 = vmax.f32 %v477, 0.0
        %v583 = vmax.f32 %v479, 0.0
        %v584 = vmax.f32 %v566, 0.0
        %v585 = vmax.f32 %v568, 0.0
        %v586 = vld [vmem:[#allocation6] sm:$0xff]
        %v587 = vld [vmem:[#allocation6 + $0x8] sm:$0xff]
        %v588 = vld [vmem:[#allocation6 + $0x10] sm:$0xff]
        %v589 = vld [vmem:[#allocation6 + $0x18] sm:$0xff]
        %v590 = vld [vmem:[#allocation6 + $0x20] sm:$0xff]
        %v591 = vld [vmem:[#allocation6 + $0x28] sm:$0xff]
        %v592 = vld [vmem:[#allocation6 + $0x30] sm:$0xff]
        %v593 = vld [vmem:[#allocation6 + $0x38] sm:$0xff]
        %v594 = vld [vmem:[#allocation6 + $0x40] sm:$0xff]
        %v595 = vld [vmem:[#allocation6 + $0x48] sm:$0xff]
        %v596 = vld [vmem:[#allocation6 + $0x50] sm:$0xff]
        %v597 = vld [vmem:[#allocation6 + $0x58] sm:$0xff]
        %v598 = vld [vmem:[#allocation6 + $0x60] sm:$0xff]
        %v599 = vld [vmem:[#allocation6 + $0x68] sm:$0xff]
        %v600 = vld [vmem:[#allocation6 + $0x70] sm:$0xff]
        %v601 = vld [vmem:[#allocation6 + $0x78] sm:$0xff]
        %v602 = vld [vmem:[#allocation6 + $0x80] sm:$0xff]
        %v603 = vld [vmem:[#allocation6 + $0x88] sm:$0xff]
        %v604 = vld [vmem:[#allocation6 + $0x90] sm:$0xff]
        %v605 = vld [vmem:[#allocation6 + $0x98] sm:$0xff]
        %v606 = vld [vmem:[#allocation6 + $0xa0] sm:$0xff]
        %v607 = vld [vmem:[#allocation6 + $0xa8] sm:$0xff]
        %v608 = vld [vmem:[#allocation6 + $0xb0] sm:$0xff]
        %v609 = vld [vmem:[#allocation6 + $0xb8] sm:$0xff]
        %v610 = vld [vmem:[#allocation6 + $0xc0] sm:$0xff]
        %v611 = vld [vmem:[#allocation6 + $0xc8] sm:$0xff]
        %v612 = vld [vmem:[#allocation6 + $0xd0] sm:$0xff]
        %v613 = vld [vmem:[#allocation6 + $0xd8] sm:$0xff]
        %v614 = vld [vmem:[#allocation6 + $0xe0] sm:$0xff]
        %v615 = vld [vmem:[#allocation6 + $0xe8] sm:$0xff]
        %v616 = vld [vmem:[#allocation6 + $0xf0] sm:$0xff]
        %v617 = vld [vmem:[#allocation6 + $0xf8] sm:$0xff]
        %v618 = vld [vmem:[#allocation6 + $0x100] sm:$0xff]
        %v619 = vld [vmem:[#allocation6 + $0x108] sm:$0xff]
        %v620 = vld [vmem:[#allocation6 + $0x110] sm:$0xff]
        %v621 = vld [vmem:[#allocation6 + $0x118] sm:$0xff]
        %v622 = vld [vmem:[#allocation6 + $0x120] sm:$0xff]
        %v623 = vld [vmem:[#allocation6 + $0x128] sm:$0xff]
        %v624 = vld [vmem:[#allocation6 + $0x130] sm:$0xff]
        %v625 = vld [vmem:[#allocation6 + $0x138] sm:$0xff]
        %v626 = vld [vmem:[#allocation6 + $0x140] sm:$0xff]
        %v627 = vld [vmem:[#allocation6 + $0x148] sm:$0xff]
        %v628 = vld [vmem:[#allocation6 + $0x150] sm:$0xff]
        %v629 = vld [vmem:[#allocation6 + $0x158] sm:$0xff]
        %v630 = vld [vmem:[#allocation6 + $0x160] sm:$0xff]
        %v631 = vld [vmem:[#allocation6 + $0x168] sm:$0xff]
        %v632 = vld [vmem:[#allocation6 + $0x170] sm:$0xff]
        %v633 = vld [vmem:[#allocation6 + $0x178] sm:$0xff]
        %v634 = vld [vmem:[#allocation6 + $0x180] sm:$0xff]
        %v635 = vld [vmem:[#allocation6 + $0x188] sm:$0xff]
        %v636 = vld [vmem:[#allocation6 + $0x190] sm:$0xff]
        %v637 = vld [vmem:[#allocation6 + $0x198] sm:$0xff]
        %v638 = vld [vmem:[#allocation6 + $0x1a0] sm:$0xff]
        %v639 = vld [vmem:[#allocation6 + $0x1a8] sm:$0xff]
        %v640 = vld [vmem:[#allocation6 + $0x1b0] sm:$0xff]
        %v641 = vld [vmem:[#allocation6 + $0x1b8] sm:$0xff]
        %v642 = vld [vmem:[#allocation6 + $0x1c0] sm:$0xff]
        %v643 = vld [vmem:[#allocation6 + $0x1c8] sm:$0xff]
        %v644 = vld [vmem:[#allocation6 + $0x1d0] sm:$0xff]
        %v645 = vld [vmem:[#allocation6 + $0x1d8] sm:$0xff]
        %v646 = vld [vmem:[#allocation6 + $0x1e0] sm:$0xff]
        %v647 = vld [vmem:[#allocation6 + $0x1e8] sm:$0xff]
        %v648 = vld [vmem:[#allocation6 + $0x1f0] sm:$0xff]
        %v649 = vld [vmem:[#allocation6 + $0x1f8] sm:$0xff]
        %v650 = vld [vmem:[%s4] sm:$0x1]
        %v652 = vlaneseq
        %v653 = vshrl.u32 %v652, 7
        %v654 = vsub.s32 0, %v653
        %v655 = vrot.slane %v650, %v654
        %657 = vmatprep.subr.mxu0 0.0
        %658 = vmatpush1.msra.mxu0 %v601
        %659 = vmatprep.subr.mxu0 0.0
        %660 = vmatpush1.msra.mxu0 %v600
        %661 = vmatprep.subr.mxu0 0.0
        %662 = vmatpush1.msra.mxu0 %v599
        %663 = vmatprep.subr.mxu0 0.0
        %664 = vmatpush1.msra.mxu0 %v598
        %665 = vmatprep.subr.mxu0 0.0
        %666 = vmatpush1.msra.mxu0 %v597
        %667 = vmatprep.subr.mxu0 0.0
        %668 = vmatpush1.msra.mxu0 %v596
        %669 = vmatprep.subr.mxu0 0.0
        %670 = vmatpush1.msra.mxu0 %v595
        %671 = vmatprep.subr.mxu0 0.0
        %672 = vmatpush1.msra.mxu0 %v594
        %673 = vmatprep.subr.mxu0 0.0
        %674 = vmatpush1.msra.mxu0 %v593
        %675 = vmatprep.subr.mxu0 0.0
        %676 = vmatpush1.msra.mxu0 %v592
        %677 = vmatprep.subr.mxu0 0.0
        %678 = vmatpush1.msra.mxu0 %v591
        %679 = vmatprep.subr.mxu0 0.0
        %680 = vmatpush1.msra.mxu0 %v590
        %681 = vmatprep.subr.mxu0 0.0
        %682 = vmatpush1.msra.mxu0 %v589
        %683 = vmatprep.subr.mxu0 0.0
        %684 = vmatpush1.msra.mxu0 %v588
        %685 = vmatprep.subr.mxu0 0.0
        %686 = vmatpush1.msra.mxu0 %v587
        %687 = vmatprep.subr.mxu0 0.0
        %688 = vmatpush1.msra.mxu0 %v586
        %689 = vmatprep.subr.mxu0 0.0
        %690 = vmatpush2.msra.mxu0 %v617
        %691 = vmatprep.subr.mxu0 0.0
        %692 = vmatpush2.msra.mxu0 %v616
        %693 = vmatprep.subr.mxu0 0.0
        %694 = vmatpush2.msra.mxu0 %v615
        %695 = vmatprep.subr.mxu0 0.0
        %696 = vmatpush2.msra.mxu0 %v614
        %697 = vmatprep.subr.mxu0 0.0
        %698 = vmatpush2.msra.mxu0 %v613
        %699 = vmatprep.subr.mxu0 0.0
        %700 = vmatpush2.msra.mxu0 %v612
        %701 = vmatprep.subr.mxu0 0.0
        %702 = vmatpush2.msra.mxu0 %v611
        %703 = vmatprep.subr.mxu0 0.0
        %704 = vmatpush2.msra.mxu0 %v610
        %705 = vmatprep.subr.mxu0 0.0
        %706 = vmatpush2.msra.mxu0 %v609
        %707 = vmatprep.subr.mxu0 0.0
        %708 = vmatpush2.msra.mxu0 %v608
        %709 = vmatprep.subr.mxu0 0.0
        %710 = vmatpush2.msra.mxu0 %v607
        %711 = vmatprep.subr.mxu0 0.0
        %712 = vmatpush2.msra.mxu0 %v606
        %713 = vmatprep.subr.mxu0 0.0
        %714 = vmatpush2.msra.mxu0 %v605
        %715 = vmatprep.subr.mxu0 0.0
        %716 = vmatpush2.msra.mxu0 %v604
        %717 = vmatprep.subr.mxu0 0.0
        %718 = vmatpush2.msra.mxu0 %v603
        %719 = vmatprep.subr.mxu0 0.0
        %720 = vmatpush2.msra.mxu0 %v602
        %721 = vmatprep.mubr.f32.mxu0 %v571
        %722 = vmatmul.mubr.f32.gmra.mxu0 %v570
        %v723 = vpop.f32.mrf.mxu0
        %v724 = vadd.f32 %v655, %v723
        %v725 = vpop.f32.mrf.mxu0
        %726 = vmatprep.mubr.f32.mxu0 %v575
        %727 = vmatmul.mubr.f32.gmra.mxu0 %v574
        %v728 = vpop.f32.mrf.mxu0
        %v729 = vadd.f32 %v655, %v728
        %v730 = vpop.f32.mrf.mxu0
        %731 = vmatprep.mubr.f32.mxu0 %v579
        %732 = vmatmul.mubr.f32.gmra.mxu0 %v578
        %v733 = vpop.f32.mrf.mxu0
        %v734 = vadd.f32 %v655, %v733
        %v735 = vpop.f32.mrf.mxu0
        %736 = vmatprep.mubr.f32.mxu0 %v583
        %737 = vmatmul.mubr.f32.gmra.mxu0 %v582
        %v738 = vpop.f32.mrf.mxu0
        %v739 = vadd.f32 %v655, %v738
        %v740 = vpop.f32.mrf.mxu0
        %741 = vdwg.mxu0
        %742 = vmatprep.subr.mxu0 0.0
        %743 = vmatpush1.msra.mxu0 %v633
        %744 = vmatprep.subr.mxu0 0.0
        %745 = vmatpush1.msra.mxu0 %v632
        %746 = vmatprep.subr.mxu0 0.0
        %747 = vmatpush1.msra.mxu0 %v631
        %748 = vmatprep.subr.mxu0 0.0
        %749 = vmatpush1.msra.mxu0 %v630
        %750 = vmatprep.subr.mxu0 0.0
        %751 = vmatpush1.msra.mxu0 %v629
        %752 = vmatprep.subr.mxu0 0.0
        %753 = vmatpush1.msra.mxu0 %v628
        %754 = vmatprep.subr.mxu0 0.0
        %755 = vmatpush1.msra.mxu0 %v627
        %756 = vmatprep.subr.mxu0 0.0
        %757 = vmatpush1.msra.mxu0 %v626
        %758 = vmatprep.subr.mxu0 0.0
        %759 = vmatpush1.msra.mxu0 %v625
        %760 = vmatprep.subr.mxu0 0.0
        %761 = vmatpush1.msra.mxu0 %v624
        %762 = vmatprep.subr.mxu0 0.0
        %763 = vmatpush1.msra.mxu0 %v623
        %764 = vmatprep.subr.mxu0 0.0
        %765 = vmatpush1.msra.mxu0 %v622
        %766 = vmatprep.subr.mxu0 0.0
        %767 = vmatpush1.msra.mxu0 %v621
        %768 = vmatprep.subr.mxu0 0.0
        %769 = vmatpush1.msra.mxu0 %v620
        %770 = vmatprep.subr.mxu0 0.0
        %771 = vmatpush1.msra.mxu0 %v619
        %772 = vmatprep.subr.mxu0 0.0
        %773 = vmatpush1.msra.mxu0 %v618
        %774 = vmatprep.subr.mxu0 0.0
        %775 = vmatpush2.msra.mxu0 %v649
        %776 = vmatprep.subr.mxu0 0.0
        %777 = vmatpush2.msra.mxu0 %v648
        %778 = vmatprep.subr.mxu0 0.0
        %779 = vmatpush2.msra.mxu0 %v647
        %780 = vmatprep.subr.mxu0 0.0
        %781 = vmatpush2.msra.mxu0 %v646
        %782 = vmatprep.subr.mxu0 0.0
        %783 = vmatpush2.msra.mxu0 %v645
        %784 = vmatprep.subr.mxu0 0.0
        %785 = vmatpush2.msra.mxu0 %v644
        %786 = vmatprep.subr.mxu0 0.0
        %787 = vmatpush2.msra.mxu0 %v643
        %788 = vmatprep.subr.mxu0 0.0
        %789 = vmatpush2.msra.mxu0 %v642
        %790 = vmatprep.subr.mxu0 0.0
        %791 = vmatpush2.msra.mxu0 %v641
        %792 = vmatprep.subr.mxu0 0.0
        %793 = vmatpush2.msra.mxu0 %v640
        %794 = vmatprep.subr.mxu0 0.0
        %795 = vmatpush2.msra.mxu0 %v639
        %796 = vmatprep.subr.mxu0 0.0
        %797 = vmatpush2.msra.mxu0 %v638
        %798 = vmatprep.subr.mxu0 0.0
        %799 = vmatpush2.msra.mxu0 %v637
        %800 = vmatprep.subr.mxu0 0.0
        %801 = vmatpush2.msra.mxu0 %v636
        %802 = vmatprep.subr.mxu0 0.0
        %803 = vmatpush2.msra.mxu0 %v635
        %804 = vmatprep.subr.mxu0 0.0
        %805 = vmatpush2.msra.mxu0 %v634
        %806 = vmatprep.mubr.f32.mxu0 %v573
        %807 = vmatmul.mubr.f32.gmra.mxu0 %v572
        %v808 = vpop.f32.mrf.mxu0
        %v809 = vadd.f32 %v724, %v808
        %v810 = vpop.f32.mrf.mxu0
        %811 = vmatprep.mubr.f32.mxu0 %v577
        %812 = vmatmul.mubr.f32.gmra.mxu0 %v576
        %v813 = vpop.f32.mrf.mxu0
        %v814 = vadd.f32 %v729, %v813
        %v815 = vpop.f32.mrf.mxu0
        %816 = vmatprep.mubr.f32.mxu0 %v581
        %817 = vmatmul.mubr.f32.gmra.mxu0 %v580
        %v818 = vpop.f32.mrf.mxu0
        %v819 = vadd.f32 %v734, %v818
        %v820 = vpop.f32.mrf.mxu0
        %821 = vmatprep.mubr.f32.mxu0 %v585
        %822 = vmatmul.mubr.f32.gmra.mxu0 %v584
        %v823 = vpop.f32.mrf.mxu0
        %v824 = vadd.f32 %v739, %v823
        %v825 = vpop.f32.mrf.mxu0
        %826 = vdwg.mxu0
        %v827 = vmax.f32 %v809, 0.0
        %v828 = vmax.f32 %v814, 0.0
        %v829 = vmax.f32 %v819, 0.0
        %v830 = vmax.f32 %v824, 0.0
        %v831 = vld [vmem:[#allocation8] sm:$0xff]
        %v832 = vld [vmem:[#allocation8 + $0x8] sm:$0xff]
        %v833 = vld [vmem:[#allocation8 + $0x10] sm:$0xff]
        %v834 = vld [vmem:[#allocation8 + $0x18] sm:$0xff]
        %v835 = vld [vmem:[#allocation8 + $0x20] sm:$0xff]
        %v836 = vld [vmem:[#allocation8 + $0x28] sm:$0xff]
        %v837 = vld [vmem:[#allocation8 + $0x30] sm:$0xff]
        %v838 = vld [vmem:[#allocation8 + $0x38] sm:$0xff]
        %v839 = vld [vmem:[#allocation8 + $0x40] sm:$0xff]
        %v840 = vld [vmem:[#allocation8 + $0x48] sm:$0xff]
        %v841 = vld [vmem:[#allocation8 + $0x50] sm:$0xff]
        %v842 = vld [vmem:[#allocation8 + $0x58] sm:$0xff]
        %v843 = vld [vmem:[#allocation8 + $0x60] sm:$0xff]
        %v844 = vld [vmem:[#allocation8 + $0x68] sm:$0xff]
        %v845 = vld [vmem:[#allocation8 + $0x70] sm:$0xff]
        %v846 = vld [vmem:[#allocation8 + $0x78] sm:$0xff]
        %v847 = vld [vmem:[%s6] sm:$0x1]
        %v849 = vlaneseq
        %v850 = vshrl.u32 %v849, 7
        %v851 = vsub.s32 0, %v850
        %v852 = vrot.slane %v847, %v851
        %854 = vmatprep.subr.mxu0 0.0
        %855 = vmatpush1.msra.mxu0 %v846
        %856 = vmatprep.subr.mxu0 0.0
        %857 = vmatpush1.msra.mxu0 %v845
        %858 = vmatprep.subr.mxu0 0.0
        %859 = vmatpush1.msra.mxu0 %v844
        %860 = vmatprep.subr.mxu0 0.0
        %861 = vmatpush1.msra.mxu0 %v843
        %862 = vmatprep.subr.mxu0 0.0
        %863 = vmatpush1.msra.mxu0 %v842
        %864 = vmatprep.subr.mxu0 0.0
        %865 = vmatpush1.msra.mxu0 %v841
        %866 = vmatprep.subr.mxu0 0.0
        %867 = vmatpush1.msra.mxu0 %v840
        %868 = vmatprep.subr.mxu0 0.0
        %869 = vmatpush1.msra.mxu0 %v839
        %870 = vmatprep.subr.mxu0 0.0
        %871 = vmatpush1.msra.mxu0 %v838
        %872 = vmatprep.subr.mxu0 0.0
        %873 = vmatpush1.msra.mxu0 %v837
        %874 = vmatprep.subr.mxu0 0.0
        %875 = vmatpush1.msra.mxu0 %v836
        %876 = vmatprep.subr.mxu0 0.0
        %877 = vmatpush1.msra.mxu0 %v835
        %878 = vmatprep.subr.mxu0 0.0
        %879 = vmatpush1.msra.mxu0 %v834
        %880 = vmatprep.subr.mxu0 0.0
        %881 = vmatpush1.msra.mxu0 %v833
        %882 = vmatprep.subr.mxu0 0.0
        %883 = vmatpush1.msra.mxu0 %v832
        %884 = vmatprep.subr.mxu0 0.0
        %885 = vmatpush1.msra.mxu0 %v831
        %886 = vmatprep.subr.mxu0 0.0
        %887 = vmatpush2.msra.mxu0 0.0
        %888 = vmatprep.subr.mxu0 0.0
        %889 = vmatpush2.msra.mxu0 0.0
        %890 = vmatprep.subr.mxu0 0.0
        %891 = vmatpush2.msra.mxu0 0.0
        %892 = vmatprep.subr.mxu0 0.0
        %893 = vmatpush2.msra.mxu0 0.0
        %894 = vmatprep.subr.mxu0 0.0
        %895 = vmatpush2.msra.mxu0 0.0
        %896 = vmatprep.subr.mxu0 0.0
        %897 = vmatpush2.msra.mxu0 0.0
        %898 = vmatprep.subr.mxu0 0.0
        %899 = vmatpush2.msra.mxu0 0.0
        %900 = vmatprep.subr.mxu0 0.0
        %901 = vmatpush2.msra.mxu0 0.0
        %902 = vmatprep.subr.mxu0 0.0
        %903 = vmatpush2.msra.mxu0 0.0
        %904 = vmatprep.subr.mxu0 0.0
        %905 = vmatpush2.msra.mxu0 0.0
        %906 = vmatprep.subr.mxu0 0.0
        %907 = vmatpush2.msra.mxu0 0.0
        %908 = vmatprep.subr.mxu0 0.0
        %909 = vmatpush2.msra.mxu0 0.0
        %910 = vmatprep.subr.mxu0 0.0
        %911 = vmatpush2.msra.mxu0 0.0
        %912 = vmatprep.subr.mxu0 0.0
        %913 = vmatpush2.msra.mxu0 0.0
        %914 = vmatprep.subr.mxu0 0.0
        %915 = vmatpush2.msra.mxu0 0.0
        %916 = vmatprep.subr.mxu0 0.0
        %917 = vmatpush2.msra.mxu0 0.0
        %918 = vmatprep.mubr.f32.mxu0 0.0
        %919 = vmatmul.mubr.f32.gmra.mxu0 %v827
        %v920 = vpop.f32.mrf.mxu0
        %v921 = vadd.f32 %v852, %v920
        %v922 = vpop.f32.mrf.mxu0
        %923 = vmatprep.mubr.f32.mxu0 0.0
        %924 = vmatmul.mubr.f32.gmra.mxu0 %v828
        %v925 = vpop.f32.mrf.mxu0
        %v926 = vadd.f32 %v852, %v925
        %v927 = vpop.f32.mrf.mxu0
        %928 = vmatprep.mubr.f32.mxu0 0.0
        %929 = vmatmul.mubr.f32.gmra.mxu0 %v829
        %v930 = vpop.f32.mrf.mxu0
        %v931 = vadd.f32 %v852, %v930
        %v932 = vpop.f32.mrf.mxu0
        %933 = vmatprep.mubr.f32.mxu0 0.0
        %934 = vmatmul.mubr.f32.gmra.mxu0 %v830
        %v935 = vpop.f32.mrf.mxu0
        %v936 = vadd.f32 %v852, %v935
        %v937 = vpop.f32.mrf.mxu0
        %938 = vdwg.mxu0
        %939 = vmax.xlane.f32.xlu0 %v921
        %v940 = vpop.xlane.xlu0 %939
        %941 = vmax.xlane.f32.xlu0 %v926
        %v942 = vpop.xlane.xlu0 %941
        %943 = vmax.xlane.f32.xlu0 %v931
        %v944 = vpop.xlane.xlu0 %943
        %945 = vmax.xlane.f32.xlu0 %v936
        %v946 = vpop.xlane.xlu0 %945
        %v947 = vsub.f32 %v921, %v940
        %v948 = vsub.f32 %v926, %v942
        %v949 = vsub.f32 %v931, %v944
        %v950 = vsub.f32 %v936, %v946
        %v951 = vmul.f32 %v947, 1.442695
        %v952 = vpow.pop %v951
        %v953 = vmul.f32 %v948, 1.442695
        %v954 = vpow.pop %v953
        %v955 = vmul.f32 %v949, 1.442695
        %v956 = vpow.pop %v955
        %v957 = vmul.f32 %v950, 1.442695
        %v958 = vpow.pop %v957
        %959 = vadd.xlane.f32.xlu0 %v952
        %v960 = vpop.xlane.xlu0 %959
        %961 = vadd.xlane.f32.xlu0 %v954
        %v962 = vpop.xlane.xlu0 %961
        %963 = vadd.xlane.f32.xlu0 %v956
        %v964 = vpop.xlane.xlu0 %963
        %965 = vadd.xlane.f32.xlu0 %v958
        %v966 = vpop.xlane.xlu0 %965
        %v967 = vlog2.pop %v960
        %v968 = vmul.f32 %v967, 0.6931472
        %v969 = vlog2.pop %v962
        %v970 = vmul.f32 %v969, 0.6931472
        %v971 = vlog2.pop %v964
        %v972 = vmul.f32 %v971, 0.6931472
        %v973 = vlog2.pop %v966
        %v974 = vmul.f32 %v973, 0.6931472
        %v975 = vsub.f32 %v947, %v968
        %v976 = vsub.f32 %v948, %v970
        %v977 = vsub.f32 %v949, %v972
        %v978 = vsub.f32 %v950, %v974
        %979 = vst [vmem:[%s316] sm:$0xff] %v975
        %980 = vst [vmem:[%s316 + $0x8] sm:$0xff] %v976
        %981 = vst [vmem:[%s316 + $0x10] sm:$0xff] %v977
        %982 = vst [vmem:[%s316 + $0x18] sm:$0xff] %v978
        %s983 = sand.u32 %s183, 1
        %s984 = scalar_lea.sflag [#allocation5], %s983
        %s985 = sand.u32 %s183, 1
        %s986 = smul.addr %s985, 32
        %s987 = scalar_lea.vmem [#allocation9], %s986
        // Predicated region
        $region61: #{tpu_custom_call.1} parent=47 // pred_check
          %p988 = pneg %p193
        $region62: #{tpu_custom_call.1} parent=47 // pred_check_branch
          %990 = sbr.rel (%p988) target = $region64
        $region63: #{tpu_custom_call.1} parent=47 // pred_region
          %s991 = smul.u32 4, %s23
          %s993 = ssub.s32 512, 512
          %994 = vsyncadd %s984, %s993
          %s995 = smul.addr %s991, 128
          %s996 = scalar_lea.hbm %s7, %s995
          %s997 = sshll.u32 %s987, 4
          %s998 = int_to_ptr.vmem [resolvable:$true] %s997
          %1003 = dma.vmem_to_hbm [thread:$0]  %s998, 512, %s996, %s984, 128, 128, 8
        $region64: #{tpu_custom_call.1} parent=47 // pred_fallthru
          _
      $region48: #{tpu_custom_call.1} parent=5 // pred_fallthru
        _
      %p1004 = scmp.le.s32.totalorder 2, %s18
      // Predicated region
      $region65: #{tpu_custom_call.1} parent=5 // pred_check
        %p1005 = pneg %p1004
      $region66: #{tpu_custom_call.1} parent=5 // pred_check_branch
        %1007 = sbr.rel (%p1005) target = $region68
      $region67: #{tpu_custom_call.1} parent=5 // pred_region
        %s1008 = ssub.s32 %s18, 2
        // Predicated region
        $region69: #{tpu_custom_call.1} parent=67 // pred_check
          %p1009 = pneg %p199
        $region70: #{tpu_custom_call.1} parent=67 // pred_check_branch
          %1011 = sbr.rel (%p1009) target = $region72
        $region71: #{tpu_custom_call.1} parent=67 // pred_region
          %s1012 = sand.u32 %s184, 1
          %s1013 = scalar_lea.sflag [#allocation5], %s1012
          %s1014 = sand.u32 %s184, 1
          %s1015 = smul.addr %s1014, 32
          %s1016 = scalar_lea.vmem [#allocation9], %s1015
          %1017 = dma.done %s1013, 512
        $region72: #{tpu_custom_call.1} parent=67 // pred_fallthru
          _
      $region68: #{tpu_custom_call.1} parent=5 // pred_fallthru
        _
    $region6: #{tpu_custom_call.1} parent=1 // loop_footer
      %s22 = sadd.s32 1, %s18
    $region7: #{tpu_custom_call.1} parent=1 // loop_footer_branch
      %17 = sbr.rel target = $region3
    $region8: #{tpu_custom_call.1} parent=1 // loop_exit
      _
    %1018 = vsyncpa [#allocation4], 1
    %s1019 = scalar_lea.sflag [#allocation4], 1
    %1020 = vsyncpa %s1019, 1
    %1021 = vsyncpa [#allocation7], 1
    %1022 = vsyncpa [#allocation5], 1
    %s1023 = scalar_lea.sflag [#allocation5], 1
    %1024 = vsyncpa %s1023, 1

</llo_original>
